<compile_context>
chip_gen: v5e
topology: v5e:2x2
jax: 0.10.0
libtpu: 0.0.40
codegen_flags: <defaults>
</compile_context>

<pallas_src>
import jax
import jax.numpy as jnp
from jax.experimental import pallas as pl
from jax.experimental.pallas import tpu as pltpu


def se_s_kernel(x_ref, wlin_ref, wconv_ref, eye_ref, blin_ref, out_ref):
    # x_ref    : (TB, C, L) VMEM   tile of TB batch elements
    # wlin_ref : (1, L)     VMEM   Linear(245, 1).weight            (resident)
    # wconv_ref: (C, C)     VMEM   Linear(C, C, bias=False).weight  (resident)
    # eye_ref  : (C, C)     VMEM   identity, precomputed in wrapper (resident)
    # blin_ref : (1, 1)     SMEM   Linear(245, 1).bias (scalar)
    # out_ref  : (TB, C, L) VMEM
    x = x_ref[...].astype(jnp.float32)                 # (TB, C, L)
    wlin = wlin_ref[...]                               # (1, L) -> broadcasts as (1, 1, L)
    bias = blin_ref[0, 0]                              # scalar from SMEM

    # Linear(245 -> 1): one scalar per (batch, channel).
    s = jnp.sum(x * wlin, axis=-1, keepdims=True) + bias          # (TB, C, 1)

    # Move channel scalars from sublanes to lanes without an XLU transpose:
    # masked broadcast with the (hoisted) identity + sublane reduction.
    s_row = jnp.sum(s * eye_ref[...], axis=1, keepdims=True)      # (TB, 1, C)

    # Linear(C -> C, bias=False): t[b, i] = sum_j Wc[i, j] * s[b, j]
    t = jnp.sum(wconv_ref[...] * s_row, axis=-1, keepdims=True)   # (TB, C, 1)

    # Softmax over the channel (sublane) axis == torch Softmax(dim=1).
    m = jnp.max(t, axis=1, keepdims=True)                         # (TB, 1, 1)
    e = jnp.exp(t - m)                                            # (TB, C, 1)
    y = e / jnp.sum(e, axis=1, keepdims=True)                     # (TB, C, 1)

    # Rescale: out[b, c, l] = x[b, c, l] * y[b, c]
    out_ref[...] = (x * y).astype(out_ref.dtype)


def se_s_forward(x, w_lin, b_lin, w_conv, *, block_batch=512,
                 vmem_limit_bytes=40 * 1024 * 1024):
    B, C, L = x.shape
    tb = max(1, min(block_batch, B))
    nb = pl.cdiv(B, tb)
    b_pad = nb * tb

    x_in = x
    if b_pad != B:
        # Zero-pad the batch remainder; padded batches are independent (softmax
        # groups never cross batches, zeros give finite values) and are sliced
        # away below, so no out-of-range rows leak into the result.
        x_in = jnp.pad(x, ((0, b_pad - B), (0, 0), (0, 0)))

    w_lin2 = w_lin.reshape(1, L).astype(jnp.float32)
    w_conv2 = w_conv.astype(jnp.float32)
    eye = jnp.eye(C, dtype=jnp.float32)
    b_lin2 = b_lin.reshape(1, 1).astype(jnp.float32)

    out = pl.pallas_call(
        se_s_kernel,
        out_shape=jax.ShapeDtypeStruct((b_pad, C, L), x.dtype),
        grid_spec=pltpu.PrefetchScalarGridSpec(
            num_scalar_prefetch=0,
            grid=(nb,),
            in_specs=[
                pl.BlockSpec((tb, C, L), lambda b: (b, 0, 0)),      # x tile
                pl.BlockSpec((1, L), lambda b: (0, 0)),             # w_lin
                pl.BlockSpec((C, C), lambda b: (0, 0)),             # w_conv
                pl.BlockSpec((C, C), lambda b: (0, 0)),             # eye
                pl.BlockSpec(memory_space=pltpu.MemorySpace.SMEM),  # b_lin scalar
            ],
            out_specs=pl.BlockSpec((tb, C, L), lambda b: (b, 0, 0)),
        ),
        compiler_params=pltpu.CompilerParams(
            dimension_semantics=("parallel",),
            vmem_limit_bytes=vmem_limit_bytes,
        ),
    )(x_in, w_lin2, w_conv2, eye, b_lin2)

    if b_pad != B:
        out = out[:B]
    return out


def se_s_reference(x, w_lin, b_lin, w_conv):
    # Pure-JAX reference mirroring the PyTorch forward (B > 1, C > 1 assumed,
    # so the .squeeze() calls only drop the trailing size-1 dim).
    y = jnp.einsum("bcl,ol->bco", x, w_lin) + b_lin       # (B, C, 1)
    s = y[..., 0]                                         # (B, C)
    t = s @ w_conv.T                                      # (B, C)
    sm = jax.nn.softmax(t[..., None], axis=1)             # (B, C, 1)
    return x * sm


if __name__ == "__main__":
    B, C, L = 16, 4, 245   # L fixed at 245 by nn.Linear(245, 1); channel = 4
    key = jax.random.PRNGKey(0)
    kx, kwl, kbl, kwc = jax.random.split(key, 4)

    x = jax.random.normal(kx, (B, C, L), dtype=jnp.float32)

    # Deterministic parameter init (PyTorch-default-style uniform bounds).
    bound_lin = 1.0 / (L ** 0.5)
    w_lin = jax.random.uniform(kwl, (1, L), minval=-bound_lin, maxval=bound_lin,
                               dtype=jnp.float32)          # Linear(245, 1).weight
    b_lin = jax.random.uniform(kbl, (1,), minval=-bound_lin, maxval=bound_lin,
                               dtype=jnp.float32)          # Linear(245, 1).bias
    bound_c = 1.0 / (C ** 0.5)
    w_conv = jax.random.uniform(kwc, (C, C), minval=-bound_c, maxval=bound_c,
                                dtype=jnp.float32)         # Linear(C, C).weight

    ref = se_s_reference(x, w_lin, b_lin, w_conv)

    # Single-block path (tb = B).
    out = jax.block_until_ready(se_s_forward(x, w_lin, b_lin, w_conv))
    assert out.shape == (B, C, L)
    assert jnp.allclose(out, ref, atol=1e-5, rtol=1e-5)

    # Multi-block path with a batch remainder (tb = 6 -> grid of 3, pad 16 -> 18)
    # to exercise the general tiling / padding logic.
    out2 = jax.block_until_ready(
        se_s_forward(x, w_lin, b_lin, w_conv, block_batch=6))
    assert out2.shape == (B, C, L)
    assert jnp.allclose(out2, ref, atol=1e-5, rtol=1e-5)

    print("KERNEL_OK")
</pallas_src>

<mosaic_0001>
module attributes {stable_mosaic.version = 11 : i64} {
  func.func @se_s_kernel(%arg0: i32, %arg1: memref<16x4x245xf32, #tpu.memory_space<vmem>>, %arg2: memref<1x245xf32, #tpu.memory_space<vmem>>, %arg3: memref<4x4xf32, #tpu.memory_space<vmem>>, %arg4: memref<4x4xf32, #tpu.memory_space<vmem>>, %arg5: memref<1x1xf32, #tpu.memory_space<smem>>, %arg6: memref<16x4x245xf32, #tpu.memory_space<vmem>>) attributes {dimension_semantics = [#tpu.dimension_semantics<parallel>], iteration_bounds = array<i64: 1>, scalar_prefetch = 0 : i64, scratch_operands = 0 : i64, tpu.core_type = #tpu.core_type<tc>, window_params = [{transform_indices = @transform_0, window_bounds = array<i64: 16, 4, 245>}, {pipeline_mode = #tpu.pipeline_mode<synchronous>, transform_indices = @transform_1, window_bounds = array<i64: 1, 245>}, {pipeline_mode = #tpu.pipeline_mode<synchronous>, transform_indices = @transform_2, window_bounds = array<i64: 4, 4>}, {pipeline_mode = #tpu.pipeline_mode<synchronous>, transform_indices = @transform_3, window_bounds = array<i64: 4, 4>}, {transform_indices = @transform_4, window_bounds = array<i64: 1, 1>}, {transform_indices = @transform_5, window_bounds = array<i64: 16, 4, 245>}]} {
    %c0 = arith.constant 0 : index
    %c0_0 = arith.constant 0 : index
    %c0_1 = arith.constant 0 : index
    %0 = vector.load %arg1[%c0, %c0_0, %c0_1] : memref<16x4x245xf32, #tpu.memory_space<vmem>>, vector<16x4x245xf32>
    %c0_2 = arith.constant 0 : index
    %c0_3 = arith.constant 0 : index
    %1 = vector.load %arg2[%c0_2, %c0_3] : memref<1x245xf32, #tpu.memory_space<vmem>>, vector<1x245xf32>
    %c0_4 = arith.constant 0 : index
    %c0_5 = arith.constant 0 : index
    %2 = memref.load %arg5[%c0_4, %c0_5] : memref<1x1xf32, #tpu.memory_space<smem>>
    %3 = vector.shape_cast %1 : vector<1x245xf32> to vector<1x1x245xf32>
    %4 = vector.broadcast %3 : vector<1x1x245xf32> to vector<16x4x245xf32>
    %5 = arith.mulf %0, %4 : vector<16x4x245xf32>
    %cst = arith.constant dense<0.000000e+00> : vector<16x4xf32>
    %6 = vector.multi_reduction <add>, %5, %cst [2] : vector<16x4x245xf32> to vector<16x4xf32>
    %7 = vector.shape_cast %6 : vector<16x4xf32> to vector<16x4x1xf32>
    %8 = vector.broadcast %2 : f32 to vector<16x4x1xf32>
    %9 = arith.addf %7, %8 : vector<16x4x1xf32>
    %c0_6 = arith.constant 0 : index
    %c0_7 = arith.constant 0 : index
    %10 = vector.load %arg4[%c0_6, %c0_7] : memref<4x4xf32, #tpu.memory_space<vmem>>, vector<4x4xf32>
    %11 = vector.shape_cast %10 : vector<4x4xf32> to vector<1x4x4xf32>
    %12 = vector.broadcast %9 : vector<16x4x1xf32> to vector<16x4x4xf32>
    %13 = vector.broadcast %11 : vector<1x4x4xf32> to vector<16x4x4xf32>
    %14 = arith.mulf %12, %13 : vector<16x4x4xf32>
    %cst_8 = arith.constant dense<0.000000e+00> : vector<16x4xf32>
    %15 = vector.multi_reduction <add>, %14, %cst_8 [1] : vector<16x4x4xf32> to vector<16x4xf32>
    %16 = vector.shape_cast %15 : vector<16x4xf32> to vector<16x1x4xf32>
    %c0_9 = arith.constant 0 : index
    %c0_10 = arith.constant 0 : index
    %17 = vector.load %arg3[%c0_9, %c0_10] : memref<4x4xf32, #tpu.memory_space<vmem>>, vector<4x4xf32>
    %18 = vector.shape_cast %17 : vector<4x4xf32> to vector<1x4x4xf32>
    %19 = vector.broadcast %18 : vector<1x4x4xf32> to vector<16x4x4xf32>
    %20 = vector.broadcast %16 : vector<16x1x4xf32> to vector<16x4x4xf32>
    %21 = arith.mulf %19, %20 : vector<16x4x4xf32>
    %cst_11 = arith.constant dense<0.000000e+00> : vector<16x4xf32>
    %22 = vector.multi_reduction <add>, %21, %cst_11 [2] : vector<16x4x4xf32> to vector<16x4xf32>
    %23 = vector.shape_cast %22 : vector<16x4xf32> to vector<16x4x1xf32>
    %cst_12 = arith.constant dense<0xFF800000> : vector<16x1xf32>
    %24 = vector.multi_reduction <maximumf>, %23, %cst_12 [1] : vector<16x4x1xf32> to vector<16x1xf32>
    %25 = vector.shape_cast %24 : vector<16x1xf32> to vector<16x1x1xf32>
    %26 = vector.broadcast %25 : vector<16x1x1xf32> to vector<16x4x1xf32>
    %27 = arith.subf %23, %26 : vector<16x4x1xf32>
    %28 = math.exp %27 : vector<16x4x1xf32>
    %cst_13 = arith.constant dense<0.000000e+00> : vector<16x1xf32>
    %29 = vector.multi_reduction <add>, %28, %cst_13 [1] : vector<16x4x1xf32> to vector<16x1xf32>
    %30 = vector.shape_cast %29 : vector<16x1xf32> to vector<16x1x1xf32>
    %31 = vector.broadcast %30 : vector<16x1x1xf32> to vector<16x4x1xf32>
    %32 = arith.divf %28, %31 : vector<16x4x1xf32>
    %33 = vector.broadcast %32 : vector<16x4x1xf32> to vector<16x4x245xf32>
    %34 = arith.mulf %0, %33 : vector<16x4x245xf32>
    %c0_14 = arith.constant 0 : index
    %c0_15 = arith.constant 0 : index
    %c0_16 = arith.constant 0 : index
    %35 = vector.load %arg6[%c0_14, %c0_15, %c0_16] : memref<16x4x245xf32, #tpu.memory_space<vmem>>, vector<16x4x245xf32>
    tpu.vector_store %arg6[%c0_14, %c0_15, %c0_16], %34 {strides = array<i32>} : memref<16x4x245xf32, #tpu.memory_space<vmem>>, vector<16x4x245xf32>,
    return
  }
  func.func @transform_0(%arg0: i32) -> (i32, i32, i32) {
    %c0_i32 = arith.constant 0 : i32
    %c0_i32_0 = arith.constant 0 : i32
    %c0_i32_1 = arith.constant 0 : i32
    return %arg0, %c0_i32, %c0_i32_0 : i32, i32, i32
  }
  func.func @transform_1(%arg0: i32) -> (i32, i32) {
    %c0_i32 = arith.constant 0 : i32
    %c0_i32_0 = arith.constant 0 : i32
    %c0_i32_1 = arith.constant 0 : i32
    return %c0_i32, %c0_i32_0 : i32, i32
  }
  func.func @transform_2(%arg0: i32) -> (i32, i32) {
    %c0_i32 = arith.constant 0 : i32
    %c0_i32_0 = arith.constant 0 : i32
    %c0_i32_1 = arith.constant 0 : i32
    return %c0_i32, %c0_i32_0 : i32, i32
  }
  func.func @transform_3(%arg0: i32) -> (i32, i32) {
    %c0_i32 = arith.constant 0 : i32
    %c0_i32_0 = arith.constant 0 : i32
    %c0_i32_1 = arith.constant 0 : i32
    return %c0_i32, %c0_i32_0 : i32, i32
  }
  func.func @transform_4(%arg0: i32) -> (i32, i32) {
    %c0_i32 = arith.constant 0 : i32
    %c0_i32_0 = arith.constant 0 : i32
    %c0_i32_1 = arith.constant 0 : i32
    return %c0_i32, %c0_i32_0 : i32, i32
  }
  func.func @transform_5(%arg0: i32) -> (i32, i32, i32) {
    %c0_i32 = arith.constant 0 : i32
    %c0_i32_0 = arith.constant 0 : i32
    %c0_i32_1 = arith.constant 0 : i32
    return %arg0, %c0_i32, %c0_i32_0 : i32, i32, i32
  }
}

</mosaic_0001>

<llo_original>
// kernel: tpu_custom_call.1
$region0: #{tpu_custom_call.1}
  #allocation0 [shape = 'u32[]', space=smem, size = 0x4, offset = 0x4, fixed_abs, tag = 'smem constant byte address 0x4 - core index']
  #allocation1 [shape = 'u32[72,128]{1,0:T(1,128)}', space=vmem, size = 0x9000, scoped, tag = 'internal scratch']
  #allocation2 [shape = 'f32[1,1]{1,0:T(1,128)S(6)}', space=smem, size = 0x200, scoped, tag = 'scoped memory for tpu_custom_call.1']
  %s0 = inlined_call_operand.hbm [shape: f32[16,4,245], index: 0, kind: input, shape index: {}]
  %s1 = inlined_call_operand.hbm [shape: f32[1,245], index: 1, kind: input, shape index: {}]
  %s2 = inlined_call_operand.hbm [shape: f32[4,4], index: 2, kind: input, shape index: {}]
  %s3 = inlined_call_operand.vmem [shape: f32[4,4], index: 3, kind: input, shape index: {}]
  %s4 = inlined_call_operand.<no memory space> [shape: f32[1,1], index: 4, kind: input, shape index: {}]
  %s5 = inlined_call_operand.hbm [shape: f32[16,4,245], index: 5, kind: output, shape index: {}]
  %s6 = sld [smem:[#allocation0]]
  $region42: #{tpu_custom_call.1} parent=0
    _
  %s8 = ssub.s32 1, %s6
  %s9 = scalar_select 0, %s8, %s6
  %10 = sst [smem:[#allocation2]] %s4
  $region1: #{tpu_custom_call.1} parent=0
    #allocation3 [shape = 'u8[65536]{0}', space=vmem, size = 0x10000, scoped, tag = 'input window, operand 0, single buffered']
    #allocation4 [shape = 's32[1]{0}', space=sflag, size = 0x4, scoped, tag = 'scoped memory for tpu_custom_call.1']
    #allocation5 [shape = 's32[1]{0}', space=sflag, size = 0x4, scoped, tag = 'scoped memory for tpu_custom_call.1']
    #allocation6 [shape = 'u8[1024]{0}', space=vmem, size = 0x400, scoped, tag = 'input window, operand 1, single buffered']
    #allocation7 [shape = 's32[1]{0}', space=sflag, size = 0x4, scoped, tag = 'scoped memory for tpu_custom_call.1']
    #allocation8 [shape = 'u8[2048]{0}', space=vmem, size = 0x800, scoped, tag = 'input window, operand 2, single buffered']
    #allocation9 [shape = 'u8[65536]{0}', space=vmem, size = 0x10000, scoped, tag = 'output window, operand 0, single buffered']
    %11 = vsyncpa [#allocation4], 0
    %12 = vsyncpa [#allocation7], 0
    %13 = vsyncpa [#allocation5], 0
    // Predicated region
    $region2: #{tpu_custom_call.1} parent=1 // pred_check
      _
    $region3: #{tpu_custom_call.1} parent=1 // pred_check_branch
      %15 = sbr.rel (0) target = $region5
    $region4: #{tpu_custom_call.1} parent=1 // pred_region
      %17 = vsyncadd [#allocation4], 0
      %s18 = sshll.u32 %s0, 4
      %s19 = int_to_ptr.hbm [resolvable:$true] %s18
      %s20 = sshll.u32 [#allocation3], 4
      %s21 = int_to_ptr.vmem [resolvable:$true] %s20
      %26 = dma.hbm_to_vmem [thread:$0]  %s19, 2048, %s21, [#allocation4], 128, 128, 8
    $region5: #{tpu_custom_call.1} parent=1 // pred_fallthru
      _
    // Predicated region
    $region6: #{tpu_custom_call.1} parent=1 // pred_check
      _
    $region7: #{tpu_custom_call.1} parent=1 // pred_check_branch
      %28 = sbr.rel (0) target = $region9
    $region8: #{tpu_custom_call.1} parent=1 // pred_region
      %30 = vsyncadd [#allocation7], 0
      %s32 = sshll.u32 %s1, 4
      %s33 = int_to_ptr.hbm [resolvable:$true] %s32
      %s34 = sshll.u32 [#allocation6], 4
      %s35 = int_to_ptr.vmem [resolvable:$true] %s34
      %37 = dma.hbm_to_vmem [thread:$0]  %s33, 32, %s35, [#allocation7]
    $region9: #{tpu_custom_call.1} parent=1 // pred_fallthru
      _
    // Predicated region
    $region10: #{tpu_custom_call.1} parent=1 // pred_check
      _
    $region11: #{tpu_custom_call.1} parent=1 // pred_check_branch
      %39 = sbr.rel (0) target = $region13
    $region12: #{tpu_custom_call.1} parent=1 // pred_region
      %41 = vsyncadd [#allocation7], 0
      %s43 = sshll.u32 %s2, 4
      %s44 = int_to_ptr.hbm [resolvable:$true] %s43
      %s45 = sshll.u32 [#allocation8], 4
      %s46 = int_to_ptr.vmem [resolvable:$true] %s45
      %48 = dma.hbm_to_vmem [thread:$0]  %s44, 64, %s46, [#allocation7]
    $region13: #{tpu_custom_call.1} parent=1 // pred_fallthru
      _
    // Predicated region
    $region14: #{tpu_custom_call.1} parent=1 // pred_check
      _
    $region15: #{tpu_custom_call.1} parent=1 // pred_check_branch
      %50 = sbr.rel (0) target = $region17
    $region16: #{tpu_custom_call.1} parent=1 // pred_region
      _
    $region17: #{tpu_custom_call.1} parent=1 // pred_fallthru
      _
    // Predicated region
    $region18: #{tpu_custom_call.1} parent=1 // pred_check
      _
    $region19: #{tpu_custom_call.1} parent=1 // pred_check_branch
      %52 = sbr.rel (0) target = $region21
    $region20: #{tpu_custom_call.1} parent=1 // pred_region
      _
    $region21: #{tpu_custom_call.1} parent=1 // pred_fallthru
      _
    // Predicated region
    $region22: #{tpu_custom_call.1} parent=1 // pred_check
      _
    $region23: #{tpu_custom_call.1} parent=1 // pred_check_branch
      %54 = sbr.rel (0) target = $region25
    $region24: #{tpu_custom_call.1} parent=1 // pred_region
      %56 = dma.done [#allocation4], 2048
    $region25: #{tpu_custom_call.1} parent=1 // pred_fallthru
      _
    // Predicated region
    $region26: #{tpu_custom_call.1} parent=1 // pred_check
      _
    $region27: #{tpu_custom_call.1} parent=1 // pred_check_branch
      %58 = sbr.rel (0) target = $region29
    $region28: #{tpu_custom_call.1} parent=1 // pred_region
      %60 = dma.done [#allocation7], 32
    $region29: #{tpu_custom_call.1} parent=1 // pred_fallthru
      _
    // Predicated region
    $region30: #{tpu_custom_call.1} parent=1 // pred_check
      _
    $region31: #{tpu_custom_call.1} parent=1 // pred_check_branch
      %62 = sbr.rel (0) target = $region33
    $region32: #{tpu_custom_call.1} parent=1 // pred_region
      %64 = dma.done [#allocation7], 64
    $region33: #{tpu_custom_call.1} parent=1 // pred_fallthru
      _
    %v65 = vld [vmem:[#allocation3] sm:$0xff]
    %v66 = vld [vmem:[#allocation3 + $0x8] sm:$0xff]
    %v67 = vld [vmem:[#allocation3 + $0x10] sm:$0xff]
    %v68 = vld [vmem:[#allocation3 + $0x18] sm:$0xff]
    %v69 = vld [vmem:[#allocation3 + $0x20] sm:$0xff]
    %v70 = vld [vmem:[#allocation3 + $0x28] sm:$0xff]
    %v71 = vld [vmem:[#allocation3 + $0x30] sm:$0xff]
    %v72 = vld [vmem:[#allocation3 + $0x38] sm:$0xff]
    %v73 = vld [vmem:[#allocation3 + $0x40] sm:$0xff]
    %v74 = vld [vmem:[#allocation3 + $0x48] sm:$0xff]
    %v75 = vld [vmem:[#allocation3 + $0x50] sm:$0xff]
    %v76 = vld [vmem:[#allocation3 + $0x58] sm:$0xff]
    %v77 = vld [vmem:[#allocation3 + $0x60] sm:$0xff]
    %v78 = vld [vmem:[#allocation3 + $0x68] sm:$0xff]
    %v79 = vld [vmem:[#allocation3 + $0x70] sm:$0xff]
    %v80 = vld [vmem:[#allocation3 + $0x78] sm:$0xff]
    %v81 = vld [vmem:[#allocation6] sm:$0x3]
    %s82 = sld [smem:[#allocation2]]
    %v84 = vperm.slane %v81, 0
    %v85 = vperm.slane %v81, 1
    %v86 = vrot.slane %v85, 4
    %vm87 = vcmask 1043456
    %v88 = vsel %vm87, %v84, %v86
    %v90 = vmul.f32 %v65, %v88
    %v91 = vmul.f32 %v66, %v88
    %v92 = vmul.f32 %v67, %v88
    %v93 = vmul.f32 %v68, %v88
    %v94 = vmul.f32 %v69, %v88
    %v95 = vmul.f32 %v70, %v88
    %v96 = vmul.f32 %v71, %v88
    %v97 = vmul.f32 %v72, %v88
    %v98 = vmul.f32 %v73, %v88
    %v99 = vmul.f32 %v74, %v88
    %v100 = vmul.f32 %v75, %v88
    %v101 = vmul.f32 %v76, %v88
    %v102 = vmul.f32 %v77, %v88
    %v103 = vmul.f32 %v78, %v88
    %v104 = vmul.f32 %v79, %v88
    %v105 = vmul.f32 %v80, %v88
    %122 = vst [vmem:[#allocation1] ss:$2 sm:$0xff] %v90
    %v123 = vld.sshfl [vmem:[#allocation1] sm:$0xff pattern:$0x75316420]
    %v124 = vld.sshfl [vmem:[#allocation1 + $0x8] sm:$0xff pattern:$0x75316420]
    %s125 = scalar_lea.vmem [#allocation1], 16
    %126 = vst [vmem:[%s125] ss:$2 sm:$0xff] %v91
    %v127 = vld.sshfl [vmem:[#allocation1 + $0x10] sm:$0xff pattern:$0x75316420]
    %v128 = vld.sshfl [vmem:[#allocation1 + $0x18] sm:$0xff pattern:$0x75316420]
    %s129 = scalar_lea.vmem [#allocation1], 32
    %130 = vst [vmem:[%s129] ss:$2 sm:$0xff] %v92
    %v131 = vld.sshfl [vmem:[#allocation1 + $0x20] sm:$0xff pattern:$0x75316420]
    %v132 = vld.sshfl [vmem:[#allocation1 + $0x28] sm:$0xff pattern:$0x75316420]
    %s133 = scalar_lea.vmem [#allocation1], 48
    %134 = vst [vmem:[%s133] ss:$2 sm:$0xff] %v93
    %v135 = vld.sshfl [vmem:[#allocation1 + $0x30] sm:$0xff pattern:$0x75316420]
    %v136 = vld.sshfl [vmem:[#allocation1 + $0x38] sm:$0xff pattern:$0x75316420]
    %137 = vst [vmem:[#allocation1] ss:$2 sm:$0xff] %v94
    %v138 = vld.sshfl [vmem:[#allocation1] sm:$0xff pattern:$0x75316420]
    %v139 = vld.sshfl [vmem:[#allocation1 + $0x8] sm:$0xff pattern:$0x75316420]
    %140 = vst [vmem:[%s125] ss:$2 sm:$0xff] %v95
    %v141 = vld.sshfl [vmem:[#allocation1 + $0x10] sm:$0xff pattern:$0x75316420]
    %v142 = vld.sshfl [vmem:[#allocation1 + $0x18] sm:$0xff pattern:$0x75316420]
    %143 = vst [vmem:[%s129] ss:$2 sm:$0xff] %v96
    %v144 = vld.sshfl [vmem:[#allocation1 + $0x20] sm:$0xff pattern:$0x75316420]
    %v145 = vld.sshfl [vmem:[#allocation1 + $0x28] sm:$0xff pattern:$0x75316420]
    %146 = vst [vmem:[%s133] ss:$2 sm:$0xff] %v97
    %v147 = vld.sshfl [vmem:[#allocation1 + $0x30] sm:$0xff pattern:$0x75316420]
    %v148 = vld.sshfl [vmem:[#allocation1 + $0x38] sm:$0xff pattern:$0x75316420]
    %149 = vst [vmem:[#allocation1] ss:$2 sm:$0xff] %v98
    %v150 = vld.sshfl [vmem:[#allocation1] sm:$0xff pattern:$0x75316420]
    %v151 = vld.sshfl [vmem:[#allocation1 + $0x8] sm:$0xff pattern:$0x75316420]
    %152 = vst [vmem:[%s125] ss:$2 sm:$0xff] %v99
    %v153 = vld.sshfl [vmem:[#allocation1 + $0x10] sm:$0xff pattern:$0x75316420]
    %v154 = vld.sshfl [vmem:[#allocation1 + $0x18] sm:$0xff pattern:$0x75316420]
    %155 = vst [vmem:[%s129] ss:$2 sm:$0xff] %v100
    %v156 = vld.sshfl [vmem:[#allocation1 + $0x20] sm:$0xff pattern:$0x75316420]
    %v157 = vld.sshfl [vmem:[#allocation1 + $0x28] sm:$0xff pattern:$0x75316420]
    %158 = vst [vmem:[%s133] ss:$2 sm:$0xff] %v101
    %v159 = vld.sshfl [vmem:[#allocation1 + $0x30] sm:$0xff pattern:$0x75316420]
    %v160 = vld.sshfl [vmem:[#allocation1 + $0x38] sm:$0xff pattern:$0x75316420]
    %161 = vst [vmem:[#allocation1] ss:$2 sm:$0xff] %v102
    %v162 = vld.sshfl [vmem:[#allocation1] sm:$0xff pattern:$0x75316420]
    %v163 = vld.sshfl [vmem:[#allocation1 + $0x8] sm:$0xff pattern:$0x75316420]
    %164 = vst [vmem:[%s125] ss:$2 sm:$0xff] %v103
    %v165 = vld.sshfl [vmem:[#allocation1 + $0x10] sm:$0xff pattern:$0x75316420]
    %v166 = vld.sshfl [vmem:[#allocation1 + $0x18] sm:$0xff pattern:$0x75316420]
    %167 = vst [vmem:[%s129] ss:$2 sm:$0xff] %v104
    %v168 = vld.sshfl [vmem:[#allocation1 + $0x20] sm:$0xff pattern:$0x75316420]
    %v169 = vld.sshfl [vmem:[#allocation1 + $0x28] sm:$0xff pattern:$0x75316420]
    %170 = vst [vmem:[%s133] ss:$2 sm:$0xff] %v105
    %v171 = vld.sshfl [vmem:[#allocation1 + $0x30] sm:$0xff pattern:$0x75316420]
    %v172 = vld.sshfl [vmem:[#allocation1 + $0x38] sm:$0xff pattern:$0x75316420]
    %v205 = vsel %vm87, %v123, 0.0
    %vm206 = vcmask 953344
    %v207 = vsel %vm206, %v124, 0.0
    %v208 = vadd.f32 %v205, %v207
    %209 = vadd.xlane.f32.xlu0 %v208
    %v210 = vpop.xlane.xlu0 %209
    %v211 = vsel %vm87, %v127, 0.0
    %v212 = vsel %vm206, %v128, 0.0
    %v213 = vadd.f32 %v211, %v212
    %214 = vadd.xlane.f32.xlu0 %v213
    %v215 = vpop.xlane.xlu0 %214
    %v216 = vsel %vm87, %v131, 0.0
    %v217 = vsel %vm206, %v132, 0.0
    %v218 = vadd.f32 %v216, %v217
    %219 = vadd.xlane.f32.xlu0 %v218
    %v220 = vpop.xlane.xlu0 %219
    %v221 = vsel %vm87, %v135, 0.0
    %v222 = vsel %vm206, %v136, 0.0
    %v223 = vadd.f32 %v221, %v222
    %224 = vadd.xlane.f32.xlu0 %v223
    %v225 = vpop.xlane.xlu0 %224
    %v226 = vsel %vm87, %v138, 0.0
    %v227 = vsel %vm206, %v139, 0.0
    %v228 = vadd.f32 %v226, %v227
    %229 = vadd.xlane.f32.xlu0 %v228
    %v230 = vpop.xlane.xlu0 %229
    %v231 = vsel %vm87, %v141, 0.0
    %v232 = vsel %vm206, %v142, 0.0
    %v233 = vadd.f32 %v231, %v232
    %234 = vadd.xlane.f32.xlu0 %v233
    %v235 = vpop.xlane.xlu0 %234
    %v236 = vsel %vm87, %v144, 0.0
    %v237 = vsel %vm206, %v145, 0.0
    %v238 = vadd.f32 %v236, %v237
    %239 = vadd.xlane.f32.xlu0 %v238
    %v240 = vpop.xlane.xlu0 %239
    %v241 = vsel %vm87, %v147, 0.0
    %v242 = vsel %vm206, %v148, 0.0
    %v243 = vadd.f32 %v241, %v242
    %244 = vadd.xlane.f32.xlu0 %v243
    %v245 = vpop.xlane.xlu0 %244
    %v246 = vsel %vm87, %v150, 0.0
    %v247 = vsel %vm206, %v151, 0.0
    %v248 = vadd.f32 %v246, %v247
    %249 = vadd.xlane.f32.xlu0 %v248
    %v250 = vpop.xlane.xlu0 %249
    %v251 = vsel %vm87, %v153, 0.0
    %v252 = vsel %vm206, %v154, 0.0
    %v253 = vadd.f32 %v251, %v252
    %254 = vadd.xlane.f32.xlu0 %v253
    %v255 = vpop.xlane.xlu0 %254
    %v256 = vsel %vm87, %v156, 0.0
    %v257 = vsel %vm206, %v157, 0.0
    %v258 = vadd.f32 %v256, %v257
    %259 = vadd.xlane.f32.xlu0 %v258
    %v260 = vpop.xlane.xlu0 %259
    %v261 = vsel %vm87, %v159, 0.0
    %v262 = vsel %vm206, %v160, 0.0
    %v263 = vadd.f32 %v261, %v262
    %264 = vadd.xlane.f32.xlu0 %v263
    %v265 = vpop.xlane.xlu0 %264
    %v266 = vsel %vm87, %v162, 0.0
    %v267 = vsel %vm206, %v163, 0.0
    %v268 = vadd.f32 %v266, %v267
    %269 = vadd.xlane.f32.xlu0 %v268
    %v270 = vpop.xlane.xlu0 %269
    %v271 = vsel %vm87, %v165, 0.0
    %v272 = vsel %vm206, %v166, 0.0
    %v273 = vadd.f32 %v271, %v272
    %274 = vadd.xlane.f32.xlu0 %v273
    %v275 = vpop.xlane.xlu0 %274
    %v276 = vsel %vm87, %v168, 0.0
    %v277 = vsel %vm206, %v169, 0.0
    %v278 = vadd.f32 %v276, %v277
    %279 = vadd.xlane.f32.xlu0 %v278
    %v280 = vpop.xlane.xlu0 %279
    %v281 = vsel %vm87, %v171, 0.0
    %v282 = vsel %vm206, %v172, 0.0
    %v283 = vadd.f32 %v281, %v282
    %284 = vadd.xlane.f32.xlu0 %v283
    %v285 = vpop.xlane.xlu0 %284
    %v286 = vstv %s82
    %v287 = vadd.f32 %v210, %v286
    %v288 = vadd.f32 %v215, %v286
    %v289 = vadd.f32 %v220, %v286
    %v290 = vadd.f32 %v225, %v286
    %v291 = vadd.f32 %v230, %v286
    %v292 = vadd.f32 %v235, %v286
    %v293 = vadd.f32 %v240, %v286
    %v294 = vadd.f32 %v245, %v286
    %v295 = vadd.f32 %v250, %v286
    %v296 = vadd.f32 %v255, %v286
    %v297 = vadd.f32 %v260, %v286
    %v298 = vadd.f32 %v265, %v286
    %v299 = vadd.f32 %v270, %v286
    %v300 = vadd.f32 %v275, %v286
    %v301 = vadd.f32 %v280, %v286
    %v302 = vadd.f32 %v285, %v286
    %v303 = vld [vmem:[%s3] sm:$0xf]
    %v304 = vmul.f32 %v287, %v303
    %v305 = vmul.f32 %v288, %v303
    %v306 = vmul.f32 %v289, %v303
    %v307 = vmul.f32 %v290, %v303
    %v308 = vmul.f32 %v291, %v303
    %v309 = vmul.f32 %v292, %v303
    %v310 = vmul.f32 %v293, %v303
    %v311 = vmul.f32 %v294, %v303
    %v312 = vmul.f32 %v295, %v303
    %v313 = vmul.f32 %v296, %v303
    %v314 = vmul.f32 %v297, %v303
    %v315 = vmul.f32 %v298, %v303
    %v316 = vmul.f32 %v299, %v303
    %v317 = vmul.f32 %v300, %v303
    %v318 = vmul.f32 %v301, %v303
    %v319 = vmul.f32 %v302, %v303
    %vm320 = vcmask 27648
    %v321 = vsel %vm320, %v304, 0.0
    %v322 = vrot.slane %v321, 4
    %v323 = vadd.f32 %v321, %v322
    %v324 = vrot.slane %v323, 2
    %v325 = vadd.f32 %v323, %v324
    %v326 = vrot.slane %v325, 1
    %v327 = vadd.f32 %v325, %v326
    %v328 = vsel %vm320, %v305, 0.0
    %v329 = vrot.slane %v328, 4
    %v330 = vadd.f32 %v328, %v329
    %v331 = vrot.slane %v330, 2
    %v332 = vadd.f32 %v330, %v331
    %v333 = vrot.slane %v332, 1
    %v334 = vadd.f32 %v332, %v333
    %v335 = vsel %vm320, %v306, 0.0
    %v336 = vrot.slane %v335, 4
    %v337 = vadd.f32 %v335, %v336
    %v338 = vrot.slane %v337, 2
    %v339 = vadd.f32 %v337, %v338
    %v340 = vrot.slane %v339, 1
    %v341 = vadd.f32 %v339, %v340
    %v342 = vsel %vm320, %v307, 0.0
    %v343 = vrot.slane %v342, 4
    %v344 = vadd.f32 %v342, %v343
    %v345 = vrot.slane %v344, 2
    %v346 = vadd.f32 %v344, %v345
    %v347 = vrot.slane %v346, 1
    %v348 = vadd.f32 %v346, %v347
    %v349 = vsel %vm320, %v308, 0.0
    %v350 = vrot.slane %v349, 4
    %v351 = vadd.f32 %v349, %v350
    %v352 = vrot.slane %v351, 2
    %v353 = vadd.f32 %v351, %v352
    %v354 = vrot.slane %v353, 1
    %v355 = vadd.f32 %v353, %v354
    %v356 = vsel %vm320, %v309, 0.0
    %v357 = vrot.slane %v356, 4
    %v358 = vadd.f32 %v356, %v357
    %v359 = vrot.slane %v358, 2
    %v360 = vadd.f32 %v358, %v359
    %v361 = vrot.slane %v360, 1
    %v362 = vadd.f32 %v360, %v361
    %v363 = vsel %vm320, %v310, 0.0
    %v364 = vrot.slane %v363, 4
    %v365 = vadd.f32 %v363, %v364
    %v366 = vrot.slane %v365, 2
    %v367 = vadd.f32 %v365, %v366
    %v368 = vrot.slane %v367, 1
    %v369 = vadd.f32 %v367, %v368
    %v370 = vsel %vm320, %v311, 0.0
    %v371 = vrot.slane %v370, 4
    %v372 = vadd.f32 %v370, %v371
    %v373 = vrot.slane %v372, 2
    %v374 = vadd.f32 %v372, %v373
    %v375 = vrot.slane %v374, 1
    %v376 = vadd.f32 %v374, %v375
    %v377 = vsel %vm320, %v312, 0.0
    %v378 = vrot.slane %v377, 4
    %v379 = vadd.f32 %v377, %v378
    %v380 = vrot.slane %v379, 2
    %v381 = vadd.f32 %v379, %v380
    %v382 = vrot.slane %v381, 1
    %v383 = vadd.f32 %v381, %v382
    %v384 = vsel %vm320, %v313, 0.0
    %v385 = vrot.slane %v384, 4
    %v386 = vadd.f32 %v384, %v385
    %v387 = vrot.slane %v386, 2
    %v388 = vadd.f32 %v386, %v387
    %v389 = vrot.slane %v388, 1
    %v390 = vadd.f32 %v388, %v389
    %v391 = vsel %vm320, %v314, 0.0
    %v392 = vrot.slane %v391, 4
    %v393 = vadd.f32 %v391, %v392
    %v394 = vrot.slane %v393, 2
    %v395 = vadd.f32 %v393, %v394
    %v396 = vrot.slane %v395, 1
    %v397 = vadd.f32 %v395, %v396
    %v398 = vsel %vm320, %v315, 0.0
    %v399 = vrot.slane %v398, 4
    %v400 = vadd.f32 %v398, %v399
    %v401 = vrot.slane %v400, 2
    %v402 = vadd.f32 %v400, %v401
    %v403 = vrot.slane %v402, 1
    %v404 = vadd.f32 %v402, %v403
    %v405 = vsel %vm320, %v316, 0.0
    %v406 = vrot.slane %v405, 4
    %v407 = vadd.f32 %v405, %v406
    %v408 = vrot.slane %v407, 2
    %v409 = vadd.f32 %v407, %v408
    %v410 = vrot.slane %v409, 1
    %v411 = vadd.f32 %v409, %v410
    %v412 = vsel %vm320, %v317, 0.0
    %v413 = vrot.slane %v412, 4
    %v414 = vadd.f32 %v412, %v413
    %v415 = vrot.slane %v414, 2
    %v416 = vadd.f32 %v414, %v415
    %v417 = vrot.slane %v416, 1
    %v418 = vadd.f32 %v416, %v417
    %v419 = vsel %vm320, %v318, 0.0
    %v420 = vrot.slane %v419, 4
    %v421 = vadd.f32 %v419, %v420
    %v422 = vrot.slane %v421, 2
    %v423 = vadd.f32 %v421, %v422
    %v424 = vrot.slane %v423, 1
    %v425 = vadd.f32 %v423, %v424
    %v426 = vsel %vm320, %v319, 0.0
    %v427 = vrot.slane %v426, 4
    %v428 = vadd.f32 %v426, %v427
    %v429 = vrot.slane %v428, 2
    %v430 = vadd.f32 %v428, %v429
    %v431 = vrot.slane %v430, 1
    %v432 = vadd.f32 %v430, %v431
    %v433 = vld [vmem:[#allocation8] sm:$0xf]
    %v434 = vmul.f32 %v433, %v327
    %v435 = vmul.f32 %v433, %v334
    %v436 = vmul.f32 %v433, %v341
    %v437 = vmul.f32 %v433, %v348
    %v438 = vmul.f32 %v433, %v355
    %v439 = vmul.f32 %v433, %v362
    %v440 = vmul.f32 %v433, %v369
    %v441 = vmul.f32 %v433, %v376
    %v442 = vmul.f32 %v433, %v383
    %v443 = vmul.f32 %v433, %v390
    %v444 = vmul.f32 %v433, %v397
    %v445 = vmul.f32 %v433, %v404
    %v446 = vmul.f32 %v433, %v411
    %v447 = vmul.f32 %v433, %v418
    %v448 = vmul.f32 %v433, %v425
    %v449 = vmul.f32 %v433, %v432
    %v450 = vsel %vm320, %v434, 0.0
    %451 = vadd.xlane.f32.xlu0 %v450
    %v452 = vpop.xlane.xlu0 %451
    %v453 = vsel %vm320, %v435, 0.0
    %454 = vadd.xlane.f32.xlu0 %v453
    %v455 = vpop.xlane.xlu0 %454
    %v456 = vsel %vm320, %v436, 0.0
    %457 = vadd.xlane.f32.xlu0 %v456
    %v458 = vpop.xlane.xlu0 %457
    %v459 = vsel %vm320, %v437, 0.0
    %460 = vadd.xlane.f32.xlu0 %v459
    %v461 = vpop.xlane.xlu0 %460
    %v462 = vsel %vm320, %v438, 0.0
    %463 = vadd.xlane.f32.xlu0 %v462
    %v464 = vpop.xlane.xlu0 %463
    %v465 = vsel %vm320, %v439, 0.0
    %466 = vadd.xlane.f32.xlu0 %v465
    %v467 = vpop.xlane.xlu0 %466
    %v468 = vsel %vm320, %v440, 0.0
    %469 = vadd.xlane.f32.xlu0 %v468
    %v470 = vpop.xlane.xlu0 %469
    %v471 = vsel %vm320, %v441, 0.0
    %472 = vadd.xlane.f32.xlu0 %v471
    %v473 = vpop.xlane.xlu0 %472
    %v474 = vsel %vm320, %v442, 0.0
    %475 = vadd.xlane.f32.xlu0 %v474
    %v476 = vpop.xlane.xlu0 %475
    %v477 = vsel %vm320, %v443, 0.0
    %478 = vadd.xlane.f32.xlu0 %v477
    %v479 = vpop.xlane.xlu0 %478
    %v480 = vsel %vm320, %v444, 0.0
    %481 = vadd.xlane.f32.xlu0 %v480
    %v482 = vpop.xlane.xlu0 %481
    %v483 = vsel %vm320, %v445, 0.0
    %484 = vadd.xlane.f32.xlu0 %v483
    %v485 = vpop.xlane.xlu0 %484
    %v486 = vsel %vm320, %v446, 0.0
    %487 = vadd.xlane.f32.xlu0 %v486
    %v488 = vpop.xlane.xlu0 %487
    %v489 = vsel %vm320, %v447, 0.0
    %490 = vadd.xlane.f32.xlu0 %v489
    %v491 = vpop.xlane.xlu0 %490
    %v492 = vsel %vm320, %v448, 0.0
    %493 = vadd.xlane.f32.xlu0 %v492
    %v494 = vpop.xlane.xlu0 %493
    %v495 = vsel %vm320, %v449, 0.0
    %496 = vadd.xlane.f32.xlu0 %v495
    %v497 = vpop.xlane.xlu0 %496
    %v498 = vsel %vm87, %v452, -inf
    %v499 = vrot.slane %v498, 4
    %v500 = vmax.f32 %v498, %v499
    %v501 = vrot.slane %v500, 2
    %v502 = vmax.f32 %v500, %v501
    %v503 = vrot.slane %v502, 1
    %v504 = vmax.f32 %v502, %v503
    %v505 = vsel %vm87, %v455, -inf
    %v506 = vrot.slane %v505, 4
    %v507 = vmax.f32 %v505, %v506
    %v508 = vrot.slane %v507, 2
    %v509 = vmax.f32 %v507, %v508
    %v510 = vrot.slane %v509, 1
    %v511 = vmax.f32 %v509, %v510
    %v512 = vsel %vm87, %v458, -inf
    %v513 = vrot.slane %v512, 4
    %v514 = vmax.f32 %v512, %v513
    %v515 = vrot.slane %v514, 2
    %v516 = vmax.f32 %v514, %v515
    %v517 = vrot.slane %v516, 1
    %v518 = vmax.f32 %v516, %v517
    %v519 = vsel %vm87, %v461, -inf
    %v520 = vrot.slane %v519, 4
    %v521 = vmax.f32 %v519, %v520
    %v522 = vrot.slane %v521, 2
    %v523 = vmax.f32 %v521, %v522
    %v524 = vrot.slane %v523, 1
    %v525 = vmax.f32 %v523, %v524
    %v526 = vsel %vm87, %v464, -inf
    %v527 = vrot.slane %v526, 4
    %v528 = vmax.f32 %v526, %v527
    %v529 = vrot.slane %v528, 2
    %v530 = vmax.f32 %v528, %v529
    %v531 = vrot.slane %v530, 1
    %v532 = vmax.f32 %v530, %v531
    %v533 = vsel %vm87, %v467, -inf
    %v534 = vrot.slane %v533, 4
    %v535 = vmax.f32 %v533, %v534
    %v536 = vrot.slane %v535, 2
    %v537 = vmax.f32 %v535, %v536
    %v538 = vrot.slane %v537, 1
    %v539 = vmax.f32 %v537, %v538
    %v540 = vsel %vm87, %v470, -inf
    %v541 = vrot.slane %v540, 4
    %v542 = vmax.f32 %v540, %v541
    %v543 = vrot.slane %v542, 2
    %v544 = vmax.f32 %v542, %v543
    %v545 = vrot.slane %v544, 1
    %v546 = vmax.f32 %v544, %v545
    %v547 = vsel %vm87, %v473, -inf
    %v548 = vrot.slane %v547, 4
    %v549 = vmax.f32 %v547, %v548
    %v550 = vrot.slane %v549, 2
    %v551 = vmax.f32 %v549, %v550
    %v552 = vrot.slane %v551, 1
    %v553 = vmax.f32 %v551, %v552
    %v554 = vsel %vm87, %v476, -inf
    %v555 = vrot.slane %v554, 4
    %v556 = vmax.f32 %v554, %v555
    %v557 = vrot.slane %v556, 2
    %v558 = vmax.f32 %v556, %v557
    %v559 = vrot.slane %v558, 1
    %v560 = vmax.f32 %v558, %v559
    %v561 = vsel %vm87, %v479, -inf
    %v562 = vrot.slane %v561, 4
    %v563 = vmax.f32 %v561, %v562
    %v564 = vrot.slane %v563, 2
    %v565 = vmax.f32 %v563, %v564
    %v566 = vrot.slane %v565, 1
    %v567 = vmax.f32 %v565, %v566
    %v568 = vsel %vm87, %v482, -inf
    %v569 = vrot.slane %v568, 4
    %v570 = vmax.f32 %v568, %v569
    %v571 = vrot.slane %v570, 2
    %v572 = vmax.f32 %v570, %v571
    %v573 = vrot.slane %v572, 1
    %v574 = vmax.f32 %v572, %v573
    %v575 = vsel %vm87, %v485, -inf
    %v576 = vrot.slane %v575, 4
    %v577 = vmax.f32 %v575, %v576
    %v578 = vrot.slane %v577, 2
    %v579 = vmax.f32 %v577, %v578
    %v580 = vrot.slane %v579, 1
    %v581 = vmax.f32 %v579, %v580
    %v582 = vsel %vm87, %v488, -inf
    %v583 = vrot.slane %v582, 4
    %v584 = vmax.f32 %v582, %v583
    %v585 = vrot.slane %v584, 2
    %v586 = vmax.f32 %v584, %v585
    %v587 = vrot.slane %v586, 1
    %v588 = vmax.f32 %v586, %v587
    %v589 = vsel %vm87, %v491, -inf
    %v590 = vrot.slane %v589, 4
    %v591 = vmax.f32 %v589, %v590
    %v592 = vrot.slane %v591, 2
    %v593 = vmax.f32 %v591, %v592
    %v594 = vrot.slane %v593, 1
    %v595 = vmax.f32 %v593, %v594
    %v596 = vsel %vm87, %v494, -inf
    %v597 = vrot.slane %v596, 4
    %v598 = vmax.f32 %v596, %v597
    %v599 = vrot.slane %v598, 2
    %v600 = vmax.f32 %v598, %v599
    %v601 = vrot.slane %v600, 1
    %v602 = vmax.f32 %v600, %v601
    %v603 = vsel %vm87, %v497, -inf
    %v604 = vrot.slane %v603, 4
    %v605 = vmax.f32 %v603, %v604
    %v606 = vrot.slane %v605, 2
    %v607 = vmax.f32 %v605, %v606
    %v608 = vrot.slane %v607, 1
    %v609 = vmax.f32 %v607, %v608
    %v610 = vsub.f32 %v452, %v504
    %v611 = vsub.f32 %v455, %v511
    %v612 = vsub.f32 %v458, %v518
    %v613 = vsub.f32 %v461, %v525
    %v614 = vsub.f32 %v464, %v532
    %v615 = vsub.f32 %v467, %v539
    %v616 = vsub.f32 %v470, %v546
    %v617 = vsub.f32 %v473, %v553
    %v618 = vsub.f32 %v476, %v560
    %v619 = vsub.f32 %v479, %v567
    %v620 = vsub.f32 %v482, %v574
    %v621 = vsub.f32 %v485, %v581
    %v622 = vsub.f32 %v488, %v588
    %v623 = vsub.f32 %v491, %v595
    %v624 = vsub.f32 %v494, %v602
    %v625 = vsub.f32 %v497, %v609
    %v626 = vmul.f32 %v610, 1.442695
    %v627 = vpow.pop %v626
    %v628 = vmul.f32 %v611, 1.442695
    %v629 = vpow.pop %v628
    %v630 = vmul.f32 %v612, 1.442695
    %v631 = vpow.pop %v630
    %v632 = vmul.f32 %v613, 1.442695
    %v633 = vpow.pop %v632
    %v634 = vmul.f32 %v614, 1.442695
    %v635 = vpow.pop %v634
    %v636 = vmul.f32 %v615, 1.442695
    %v637 = vpow.pop %v636
    %v638 = vmul.f32 %v616, 1.442695
    %v639 = vpow.pop %v638
    %v640 = vmul.f32 %v617, 1.442695
    %v641 = vpow.pop %v640
    %v642 = vmul.f32 %v618, 1.442695
    %v643 = vpow.pop %v642
    %v644 = vmul.f32 %v619, 1.442695
    %v645 = vpow.pop %v644
    %v646 = vmul.f32 %v620, 1.442695
    %v647 = vpow.pop %v646
    %v648 = vmul.f32 %v621, 1.442695
    %v649 = vpow.pop %v648
    %v650 = vmul.f32 %v622, 1.442695
    %v651 = vpow.pop %v650
    %v652 = vmul.f32 %v623, 1.442695
    %v653 = vpow.pop %v652
    %v654 = vmul.f32 %v624, 1.442695
    %v655 = vpow.pop %v654
    %v656 = vmul.f32 %v625, 1.442695
    %v657 = vpow.pop %v656
    %v658 = vsel %vm87, %v627, 0.0
    %v659 = vrot.slane %v658, 4
    %v660 = vadd.f32 %v658, %v659
    %v661 = vrot.slane %v660, 2
    %v662 = vadd.f32 %v660, %v661
    %v663 = vrot.slane %v662, 1
    %v664 = vadd.f32 %v662, %v663
    %v665 = vsel %vm87, %v629, 0.0
    %v666 = vrot.slane %v665, 4
    %v667 = vadd.f32 %v665, %v666
    %v668 = vrot.slane %v667, 2
    %v669 = vadd.f32 %v667, %v668
    %v670 = vrot.slane %v669, 1
    %v671 = vadd.f32 %v669, %v670
    %v672 = vsel %vm87, %v631, 0.0
    %v673 = vrot.slane %v672, 4
    %v674 = vadd.f32 %v672, %v673
    %v675 = vrot.slane %v674, 2
    %v676 = vadd.f32 %v674, %v675
    %v677 = vrot.slane %v676, 1
    %v678 = vadd.f32 %v676, %v677
    %v679 = vsel %vm87, %v633, 0.0
    %v680 = vrot.slane %v679, 4
    %v681 = vadd.f32 %v679, %v680
    %v682 = vrot.slane %v681, 2
    %v683 = vadd.f32 %v681, %v682
    %v684 = vrot.slane %v683, 1
    %v685 = vadd.f32 %v683, %v684
    %v686 = vsel %vm87, %v635, 0.0
    %v687 = vrot.slane %v686, 4
    %v688 = vadd.f32 %v686, %v687
    %v689 = vrot.slane %v688, 2
    %v690 = vadd.f32 %v688, %v689
    %v691 = vrot.slane %v690, 1
    %v692 = vadd.f32 %v690, %v691
    %v693 = vsel %vm87, %v637, 0.0
    %v694 = vrot.slane %v693, 4
    %v695 = vadd.f32 %v693, %v694
    %v696 = vrot.slane %v695, 2
    %v697 = vadd.f32 %v695, %v696
    %v698 = vrot.slane %v697, 1
    %v699 = vadd.f32 %v697, %v698
    %v700 = vsel %vm87, %v639, 0.0
    %v701 = vrot.slane %v700, 4
    %v702 = vadd.f32 %v700, %v701
    %v703 = vrot.slane %v702, 2
    %v704 = vadd.f32 %v702, %v703
    %v705 = vrot.slane %v704, 1
    %v706 = vadd.f32 %v704, %v705
    %v707 = vsel %vm87, %v641, 0.0
    %v708 = vrot.slane %v707, 4
    %v709 = vadd.f32 %v707, %v708
    %v710 = vrot.slane %v709, 2
    %v711 = vadd.f32 %v709, %v710
    %v712 = vrot.slane %v711, 1
    %v713 = vadd.f32 %v711, %v712
    %v714 = vsel %vm87, %v643, 0.0
    %v715 = vrot.slane %v714, 4
    %v716 = vadd.f32 %v714, %v715
    %v717 = vrot.slane %v716, 2
    %v718 = vadd.f32 %v716, %v717
    %v719 = vrot.slane %v718, 1
    %v720 = vadd.f32 %v718, %v719
    %v721 = vsel %vm87, %v645, 0.0
    %v722 = vrot.slane %v721, 4
    %v723 = vadd.f32 %v721, %v722
    %v724 = vrot.slane %v723, 2
    %v725 = vadd.f32 %v723, %v724
    %v726 = vrot.slane %v725, 1
    %v727 = vadd.f32 %v725, %v726
    %v728 = vsel %vm87, %v647, 0.0
    %v729 = vrot.slane %v728, 4
    %v730 = vadd.f32 %v728, %v729
    %v731 = vrot.slane %v730, 2
    %v732 = vadd.f32 %v730, %v731
    %v733 = vrot.slane %v732, 1
    %v734 = vadd.f32 %v732, %v733
    %v735 = vsel %vm87, %v649, 0.0
    %v736 = vrot.slane %v735, 4
    %v737 = vadd.f32 %v735, %v736
    %v738 = vrot.slane %v737, 2
    %v739 = vadd.f32 %v737, %v738
    %v740 = vrot.slane %v739, 1
    %v741 = vadd.f32 %v739, %v740
    %v742 = vsel %vm87, %v651, 0.0
    %v743 = vrot.slane %v742, 4
    %v744 = vadd.f32 %v742, %v743
    %v745 = vrot.slane %v744, 2
    %v746 = vadd.f32 %v744, %v745
    %v747 = vrot.slane %v746, 1
    %v748 = vadd.f32 %v746, %v747
    %v749 = vsel %vm87, %v653, 0.0
    %v750 = vrot.slane %v749, 4
    %v751 = vadd.f32 %v749, %v750
    %v752 = vrot.slane %v751, 2
    %v753 = vadd.f32 %v751, %v752
    %v754 = vrot.slane %v753, 1
    %v755 = vadd.f32 %v753, %v754
    %v756 = vsel %vm87, %v655, 0.0
    %v757 = vrot.slane %v756, 4
    %v758 = vadd.f32 %v756, %v757
    %v759 = vrot.slane %v758, 2
    %v760 = vadd.f32 %v758, %v759
    %v761 = vrot.slane %v760, 1
    %v762 = vadd.f32 %v760, %v761
    %v763 = vsel %vm87, %v657, 0.0
    %v764 = vrot.slane %v763, 4
    %v765 = vadd.f32 %v763, %v764
    %v766 = vrot.slane %v765, 2
    %v767 = vadd.f32 %v765, %v766
    %v768 = vrot.slane %v767, 1
    %v769 = vadd.f32 %v767, %v768
    %v770 = vrcp.pop %v664
    %v771 = vmul.f32 %v664, %v770
    %v772 = vsub.f32 1.0, %v771
    %v773 = vmul.f32 %v770, %v772
    %v774 = vadd.f32 %v770, %v773
    %vm775 = vweird.f32 %v664
    %vm776 = vweird.f32 %v770
    %vm777 = vmor %vm775, %vm776
    %v778 = vsel %vm777, %v770, %v774
    %v779 = vand.u32 2147483647, %v664
    %vm780 = vcmp.eq.f32.partialorder %v779, 8.507059e+37
    %v781 = vand.u32 %v664, 2147483648
    %v782 = vor.u32 1.1754944e-38, %v781
    %v783 = vsel %vm780, %v782, %v778
    %v784 = vmul.f32 %v627, %v783
    %v785 = vrcp.pop %v671
    %v786 = vmul.f32 %v671, %v785
    %v787 = vsub.f32 1.0, %v786
    %v788 = vmul.f32 %v785, %v787
    %v789 = vadd.f32 %v785, %v788
    %vm790 = vweird.f32 %v671
    %vm791 = vweird.f32 %v785
    %vm792 = vmor %vm790, %vm791
    %v793 = vsel %vm792, %v785, %v789
    %v794 = vand.u32 2147483647, %v671
    %vm795 = vcmp.eq.f32.partialorder %v794, 8.507059e+37
    %v796 = vand.u32 %v671, 2147483648
    %v797 = vor.u32 1.1754944e-38, %v796
    %v798 = vsel %vm795, %v797, %v793
    %v799 = vmul.f32 %v629, %v798
    %v800 = vrcp.pop %v678
    %v801 = vmul.f32 %v678, %v800
    %v802 = vsub.f32 1.0, %v801
    %v803 = vmul.f32 %v800, %v802
    %v804 = vadd.f32 %v800, %v803
    %vm805 = vweird.f32 %v678
    %vm806 = vweird.f32 %v800
    %vm807 = vmor %vm805, %vm806
    %v808 = vsel %vm807, %v800, %v804
    %v809 = vand.u32 2147483647, %v678
    %vm810 = vcmp.eq.f32.partialorder %v809, 8.507059e+37
    %v811 = vand.u32 %v678, 2147483648
    %v812 = vor.u32 1.1754944e-38, %v811
    %v813 = vsel %vm810, %v812, %v808
    %v814 = vmul.f32 %v631, %v813
    %v815 = vrcp.pop %v685
    %v816 = vmul.f32 %v685, %v815
    %v817 = vsub.f32 1.0, %v816
    %v818 = vmul.f32 %v815, %v817
    %v819 = vadd.f32 %v815, %v818
    %vm820 = vweird.f32 %v685
    %vm821 = vweird.f32 %v815
    %vm822 = vmor %vm820, %vm821
    %v823 = vsel %vm822, %v815, %v819
    %v824 = vand.u32 2147483647, %v685
    %vm825 = vcmp.eq.f32.partialorder %v824, 8.507059e+37
    %v826 = vand.u32 %v685, 2147483648
    %v827 = vor.u32 1.1754944e-38, %v826
    %v828 = vsel %vm825, %v827, %v823
    %v829 = vmul.f32 %v633, %v828
    %v830 = vrcp.pop %v692
    %v831 = vmul.f32 %v692, %v830
    %v832 = vsub.f32 1.0, %v831
    %v833 = vmul.f32 %v830, %v832
    %v834 = vadd.f32 %v830, %v833
    %vm835 = vweird.f32 %v692
    %vm836 = vweird.f32 %v830
    %vm837 = vmor %vm835, %vm836
    %v838 = vsel %vm837, %v830, %v834
    %v839 = vand.u32 2147483647, %v692
    %vm840 = vcmp.eq.f32.partialorder %v839, 8.507059e+37
    %v841 = vand.u32 %v692, 2147483648
    %v842 = vor.u32 1.1754944e-38, %v841
    %v843 = vsel %vm840, %v842, %v838
    %v844 = vmul.f32 %v635, %v843
    %v845 = vrcp.pop %v699
    %v846 = vmul.f32 %v699, %v845
    %v847 = vsub.f32 1.0, %v846
    %v848 = vmul.f32 %v845, %v847
    %v849 = vadd.f32 %v845, %v848
    %vm850 = vweird.f32 %v699
    %vm851 = vweird.f32 %v845
    %vm852 = vmor %vm850, %vm851
    %v853 = vsel %vm852, %v845, %v849
    %v854 = vand.u32 2147483647, %v699
    %vm855 = vcmp.eq.f32.partialorder %v854, 8.507059e+37
    %v856 = vand.u32 %v699, 2147483648
    %v857 = vor.u32 1.1754944e-38, %v856
    %v858 = vsel %vm855, %v857, %v853
    %v859 = vmul.f32 %v637, %v858
    %v860 = vrcp.pop %v706
    %v861 = vmul.f32 %v706, %v860
    %v862 = vsub.f32 1.0, %v861
    %v863 = vmul.f32 %v860, %v862
    %v864 = vadd.f32 %v860, %v863
    %vm865 = vweird.f32 %v706
    %vm866 = vweird.f32 %v860
    %vm867 = vmor %vm865, %vm866
    %v868 = vsel %vm867, %v860, %v864
    %v869 = vand.u32 2147483647, %v706
    %vm870 = vcmp.eq.f32.partialorder %v869, 8.507059e+37
    %v871 = vand.u32 %v706, 2147483648
    %v872 = vor.u32 1.1754944e-38, %v871
    %v873 = vsel %vm870, %v872, %v868
    %v874 = vmul.f32 %v639, %v873
    %v875 = vrcp.pop %v713
    %v876 = vmul.f32 %v713, %v875
    %v877 = vsub.f32 1.0, %v876
    %v878 = vmul.f32 %v875, %v877
    %v879 = vadd.f32 %v875, %v878
    %vm880 = vweird.f32 %v713
    %vm881 = vweird.f32 %v875
    %vm882 = vmor %vm880, %vm881
    %v883 = vsel %vm882, %v875, %v879
    %v884 = vand.u32 2147483647, %v713
    %vm885 = vcmp.eq.f32.partialorder %v884, 8.507059e+37
    %v886 = vand.u32 %v713, 2147483648
    %v887 = vor.u32 1.1754944e-38, %v886
    %v888 = vsel %vm885, %v887, %v883
    %v889 = vmul.f32 %v641, %v888
    %v890 = vrcp.pop %v720
    %v891 = vmul.f32 %v720, %v890
    %v892 = vsub.f32 1.0, %v891
    %v893 = vmul.f32 %v890, %v892
    %v894 = vadd.f32 %v890, %v893
    %vm895 = vweird.f32 %v720
    %vm896 = vweird.f32 %v890
    %vm897 = vmor %vm895, %vm896
    %v898 = vsel %vm897, %v890, %v894
    %v899 = vand.u32 2147483647, %v720
    %vm900 = vcmp.eq.f32.partialorder %v899, 8.507059e+37
    %v901 = vand.u32 %v720, 2147483648
    %v902 = vor.u32 1.1754944e-38, %v901
    %v903 = vsel %vm900, %v902, %v898
    %v904 = vmul.f32 %v643, %v903
    %v905 = vrcp.pop %v727
    %v906 = vmul.f32 %v727, %v905
    %v907 = vsub.f32 1.0, %v906
    %v908 = vmul.f32 %v905, %v907
    %v909 = vadd.f32 %v905, %v908
    %vm910 = vweird.f32 %v727
    %vm911 = vweird.f32 %v905
    %vm912 = vmor %vm910, %vm911
    %v913 = vsel %vm912, %v905, %v909
    %v914 = vand.u32 2147483647, %v727
    %vm915 = vcmp.eq.f32.partialorder %v914, 8.507059e+37
    %v916 = vand.u32 %v727, 2147483648
    %v917 = vor.u32 1.1754944e-38, %v916
    %v918 = vsel %vm915, %v917, %v913
    %v919 = vmul.f32 %v645, %v918
    %v920 = vrcp.pop %v734
    %v921 = vmul.f32 %v734, %v920
    %v922 = vsub.f32 1.0, %v921
    %v923 = vmul.f32 %v920, %v922
    %v924 = vadd.f32 %v920, %v923
    %vm925 = vweird.f32 %v734
    %vm926 = vweird.f32 %v920
    %vm927 = vmor %vm925, %vm926
    %v928 = vsel %vm927, %v920, %v924
    %v929 = vand.u32 2147483647, %v734
    %vm930 = vcmp.eq.f32.partialorder %v929, 8.507059e+37
    %v931 = vand.u32 %v734, 2147483648
    %v932 = vor.u32 1.1754944e-38, %v931
    %v933 = vsel %vm930, %v932, %v928
    %v934 = vmul.f32 %v647, %v933
    %v935 = vrcp.pop %v741
    %v936 = vmul.f32 %v741, %v935
    %v937 = vsub.f32 1.0, %v936
    %v938 = vmul.f32 %v935, %v937
    %v939 = vadd.f32 %v935, %v938
    %vm940 = vweird.f32 %v741
    %vm941 = vweird.f32 %v935
    %vm942 = vmor %vm940, %vm941
    %v943 = vsel %vm942, %v935, %v939
    %v944 = vand.u32 2147483647, %v741
    %vm945 = vcmp.eq.f32.partialorder %v944, 8.507059e+37
    %v946 = vand.u32 %v741, 2147483648
    %v947 = vor.u32 1.1754944e-38, %v946
    %v948 = vsel %vm945, %v947, %v943
    %v949 = vmul.f32 %v649, %v948
    %v950 = vrcp.pop %v748
    %v951 = vmul.f32 %v748, %v950
    %v952 = vsub.f32 1.0, %v951
    %v953 = vmul.f32 %v950, %v952
    %v954 = vadd.f32 %v950, %v953
    %vm955 = vweird.f32 %v748
    %vm956 = vweird.f32 %v950
    %vm957 = vmor %vm955, %vm956
    %v958 = vsel %vm957, %v950, %v954
    %v959 = vand.u32 2147483647, %v748
    %vm960 = vcmp.eq.f32.partialorder %v959, 8.507059e+37
    %v961 = vand.u32 %v748, 2147483648
    %v962 = vor.u32 1.1754944e-38, %v961
    %v963 = vsel %vm960, %v962, %v958
    %v964 = vmul.f32 %v651, %v963
    %v965 = vrcp.pop %v755
    %v966 = vmul.f32 %v755, %v965
    %v967 = vsub.f32 1.0, %v966
    %v968 = vmul.f32 %v965, %v967
    %v969 = vadd.f32 %v965, %v968
    %vm970 = vweird.f32 %v755
    %vm971 = vweird.f32 %v965
    %vm972 = vmor %vm970, %vm971
    %v973 = vsel %vm972, %v965, %v969
    %v974 = vand.u32 2147483647, %v755
    %vm975 = vcmp.eq.f32.partialorder %v974, 8.507059e+37
    %v976 = vand.u32 %v755, 2147483648
    %v977 = vor.u32 1.1754944e-38, %v976
    %v978 = vsel %vm975, %v977, %v973
    %v979 = vmul.f32 %v653, %v978
    %v980 = vrcp.pop %v762
    %v981 = vmul.f32 %v762, %v980
    %v982 = vsub.f32 1.0, %v981
    %v983 = vmul.f32 %v980, %v982
    %v984 = vadd.f32 %v980, %v983
    %vm985 = vweird.f32 %v762
    %vm986 = vweird.f32 %v980
    %vm987 = vmor %vm985, %vm986
    %v988 = vsel %vm987, %v980, %v984
    %v989 = vand.u32 2147483647, %v762
    %vm990 = vcmp.eq.f32.partialorder %v989, 8.507059e+37
    %v991 = vand.u32 %v762, 2147483648
    %v992 = vor.u32 1.1754944e-38, %v991
    %v993 = vsel %vm990, %v992, %v988
    %v994 = vmul.f32 %v655, %v993
    %v995 = vrcp.pop %v769
    %v996 = vmul.f32 %v769, %v995
    %v997 = vsub.f32 1.0, %v996
    %v998 = vmul.f32 %v995, %v997
    %v999 = vadd.f32 %v995, %v998
    %vm1000 = vweird.f32 %v769
    %vm1001 = vweird.f32 %v995
    %vm1002 = vmor %vm1000, %vm1001
    %v1003 = vsel %vm1002, %v995, %v999
    %v1004 = vand.u32 2147483647, %v769
    %vm1005 = vcmp.eq.f32.partialorder %v1004, 8.507059e+37
    %v1006 = vand.u32 %v769, 2147483648
    %v1007 = vor.u32 1.1754944e-38, %v1006
    %v1008 = vsel %vm1005, %v1007, %v1003
    %v1009 = vmul.f32 %v657, %v1008
    %v1027 = vunpack.c.l.s4 839922192
    %v1028 = vunpack.c.0.s8 %v1027
    %v1029 = vperm.slane %v784, %v1028
    %v1031 = vunpack.c.l.s4 839922192
    %v1032 = vunpack.c.0.s8 %v1031
    %v1033 = vperm.slane %v799, %v1032
    %v1035 = vunpack.c.l.s4 839922192
    %v1036 = vunpack.c.0.s8 %v1035
    %v1037 = vperm.slane %v814, %v1036
    %v1039 = vunpack.c.l.s4 839922192
    %v1040 = vunpack.c.0.s8 %v1039
    %v1041 = vperm.slane %v829, %v1040
    %v1043 = vunpack.c.l.s4 839922192
    %v1044 = vunpack.c.0.s8 %v1043
    %v1045 = vperm.slane %v844, %v1044
    %v1047 = vunpack.c.l.s4 839922192
    %v1048 = vunpack.c.0.s8 %v1047
    %v1049 = vperm.slane %v859, %v1048
    %v1051 = vunpack.c.l.s4 839922192
    %v1052 = vunpack.c.0.s8 %v1051
    %v1053 = vperm.slane %v874, %v1052
    %v1055 = vunpack.c.l.s4 839922192
    %v1056 = vunpack.c.0.s8 %v1055
    %v1057 = vperm.slane %v889, %v1056
    %v1059 = vunpack.c.l.s4 839922192
    %v1060 = vunpack.c.0.s8 %v1059
    %v1061 = vperm.slane %v904, %v1060
    %v1063 = vunpack.c.l.s4 839922192
    %v1064 = vunpack.c.0.s8 %v1063
    %v1065 = vperm.slane %v919, %v1064
    %v1067 = vunpack.c.l.s4 839922192
    %v1068 = vunpack.c.0.s8 %v1067
    %v1069 = vperm.slane %v934, %v1068
    %v1071 = vunpack.c.l.s4 839922192
    %v1072 = vunpack.c.0.s8 %v1071
    %v1073 = vperm.slane %v949, %v1072
    %v1075 = vunpack.c.l.s4 839922192
    %v1076 = vunpack.c.0.s8 %v1075
    %v1077 = vperm.slane %v964, %v1076
    %v1079 = vunpack.c.l.s4 839922192
    %v1080 = vunpack.c.0.s8 %v1079
    %v1081 = vperm.slane %v979, %v1080
    %v1083 = vunpack.c.l.s4 839922192
    %v1084 = vunpack.c.0.s8 %v1083
    %v1085 = vperm.slane %v994, %v1084
    %v1087 = vunpack.c.l.s4 839922192
    %v1088 = vunpack.c.0.s8 %v1087
    %v1089 = vperm.slane %v1009, %v1088
    %v1106 = vmul.f32 %v65, %v1029
    %v1107 = vmul.f32 %v66, %v1033
    %v1108 = vmul.f32 %v67, %v1037
    %v1109 = vmul.f32 %v68, %v1041
    %v1110 = vmul.f32 %v69, %v1045
    %v1111 = vmul.f32 %v70, %v1049
    %v1112 = vmul.f32 %v71, %v1053
    %v1113 = vmul.f32 %v72, %v1057
    %v1114 = vmul.f32 %v73, %v1061
    %v1115 = vmul.f32 %v74, %v1065
    %v1116 = vmul.f32 %v75, %v1069
    %v1117 = vmul.f32 %v76, %v1073
    %v1118 = vmul.f32 %v77, %v1077
    %v1119 = vmul.f32 %v78, %v1081
    %v1120 = vmul.f32 %v79, %v1085
    %v1121 = vmul.f32 %v80, %v1089
    %vm1122 = vcmask 957444
    %vm1123 = vmor %vm1122, %vm87
    %1124 = vst.msk [vmem:[#allocation9] sm:$0xff] %vm1123, %v1106
    %1125 = vst.msk [vmem:[#allocation9 + $0x8] sm:$0xff] %vm1123, %v1107
    %1126 = vst.msk [vmem:[#allocation9 + $0x10] sm:$0xff] %vm1123, %v1108
    %1127 = vst.msk [vmem:[#allocation9 + $0x18] sm:$0xff] %vm1123, %v1109
    %1128 = vst.msk [vmem:[#allocation9 + $0x20] sm:$0xff] %vm1123, %v1110
    %1129 = vst.msk [vmem:[#allocation9 + $0x28] sm:$0xff] %vm1123, %v1111
    %1130 = vst.msk [vmem:[#allocation9 + $0x30] sm:$0xff] %vm1123, %v1112
    %1131 = vst.msk [vmem:[#allocation9 + $0x38] sm:$0xff] %vm1123, %v1113
    %1132 = vst.msk [vmem:[#allocation9 + $0x40] sm:$0xff] %vm1123, %v1114
    %1133 = vst.msk [vmem:[#allocation9 + $0x48] sm:$0xff] %vm1123, %v1115
    %1134 = vst.msk [vmem:[#allocation9 + $0x50] sm:$0xff] %vm1123, %v1116
    %1135 = vst.msk [vmem:[#allocation9 + $0x58] sm:$0xff] %vm1123, %v1117
    %1136 = vst.msk [vmem:[#allocation9 + $0x60] sm:$0xff] %vm1123, %v1118
    %1137 = vst.msk [vmem:[#allocation9 + $0x68] sm:$0xff] %vm1123, %v1119
    %1138 = vst.msk [vmem:[#allocation9 + $0x70] sm:$0xff] %vm1123, %v1120
    %1139 = vst.msk [vmem:[#allocation9 + $0x78] sm:$0xff] %vm1123, %v1121
    // Predicated region
    $region34: #{tpu_custom_call.1} parent=1 // pred_check
      _
    $region35: #{tpu_custom_call.1} parent=1 // pred_check_branch
      %1141 = sbr.rel (0) target = $region37
    $region36: #{tpu_custom_call.1} parent=1 // pred_region
      %1143 = vsyncadd [#allocation5], 0
      %s1144 = sshll.u32 [#allocation9], 4
      %s1145 = int_to_ptr.vmem [resolvable:$true] %s1144
      %s1146 = sshll.u32 %s5, 4
      %s1147 = int_to_ptr.hbm [resolvable:$true] %s1146
      %1152 = dma.vmem_to_hbm [thread:$0]  %s1145, 2048, %s1147, [#allocation5], 128, 128, 8
    $region37: #{tpu_custom_call.1} parent=1 // pred_fallthru
      _
    // Predicated region
    $region38: #{tpu_custom_call.1} parent=1 // pred_check
      _
    $region39: #{tpu_custom_call.1} parent=1 // pred_check_branch
      %1154 = sbr.rel (0) target = $region41
    $region40: #{tpu_custom_call.1} parent=1 // pred_region
      %1156 = dma.done [#allocation5], 2048
    $region41: #{tpu_custom_call.1} parent=1 // pred_fallthru
      _
    %1157 = vsyncpa [#allocation4], 1
    %1158 = vsyncpa [#allocation7], 1
    %1159 = vsyncpa [#allocation5], 1

</llo_original>
